<compile_context>
chip_gen: v5e
topology: v5e:2x2
jax: 0.10.0
libtpu: 0.0.40
codegen_flags: <defaults>
</compile_context>

<pallas_src>
import functools

import jax
import jax.numpy as jnp
from jax.experimental import pallas as pl
from jax.experimental.pallas import tpu as pltpu


def _round_up(n, m):
    return ((n + m - 1) // m) * m


def _tpu_info():
    try:
        return pltpu.get_tpu_info()
    except Exception:
        return None


def _vmem_capacity_bytes():
    info = _tpu_info()
    if info is not None:
        v = getattr(info, "vmem_capacity_bytes", None)
        try:
            if v is not None and int(v) > 0:
                return int(v)
        except Exception:
            pass
    return 64 << 20  # conservative default (v7x per-TensorCore VMEM)


def _num_tensorcores():
    info = _tpu_info()
    if info is not None:
        for name in ("num_tensorcores", "tensorcore_count", "num_cores",
                     "core_count"):
            v = getattr(info, name, None)
            try:
                if v is not None and int(v) >= 1:
                    return int(v)
            except Exception:
                pass
    return 1  # safe fallback (v5e / v6e have a single TensorCore)


def _mse_masked_kernel(x_ref, t_ref, w_ref, out_ref, *,
                       n_valid_rows, tile_rows, out_rows):
    c = pl.program_id(0)          # "parallel" per-TensorCore axis
    i = pl.program_id(1)          # "arbitrary" reduction axis (resident acc)
    inner = pl.num_programs(1)

    @pl.when(i == 0)
    def _init():
        out_ref[...] = jnp.zeros_like(out_ref)

    # Cast in-vreg right after the load; HBM/DMA stays in the native dtype.
    x = x_ref[...].astype(jnp.float32)        # (tile_rows, D)
    t = t_ref[...].astype(jnp.float32)        # (tile_rows, D)
    w = w_ref[...]                            # (tile_rows, 1) f32 mask*norm
    d = x - t
    sq = d * d * w                            # (tile_rows, D)

    d_dim = sq.shape[-1]
    n_sub = tile_rows // out_rows             # sublane-group fold factor
    row0 = (c * inner + i) * tile_rows
    is_full = row0 + tile_rows <= n_valid_rows

    @pl.when(is_full)
    def _interior():
        # Fast path: weight already encodes the sequence mask; the reshape is
        # a vreg-aligned sublane split and the axis-0 sum is pure VPU adds.
        folded = jnp.sum(sq.reshape(n_sub, out_rows, d_dim), axis=0)
        out_ref[...] += folded[None, :, :]

    @pl.when(jnp.logical_not(is_full))
    def _edge():
        # Edge / clamped-duplicate tile: the un-DMA'd tail of the block holds
        # stale VMEM (possibly inf/NaN), so this must stay a true select, not
        # a multiply-by-zero mask.
        row = row0 + jax.lax.broadcasted_iota(jnp.int32, (tile_rows, 1), 0)
        good = jnp.where(row < n_valid_rows, sq, 0.0)
        folded = jnp.sum(good.reshape(n_sub, out_rows, d_dim), axis=0)
        out_ref[...] += folded[None, :, :]


def mse_loss_masked(x, target, length, *, seq_len_norm=False, tile_rows=None):
    """Pallas implementation of MSELossMasked.forward (returns f32 scalar)."""
    B, T, D = x.shape
    length = length.astype(jnp.int32)

    if B == 0 or T == 0 or D == 0:
        return jnp.float32(0.0)

    # --- per-(b,t) weight: sequence mask + normalization (tiny, plain JAX) --
    len_c = jnp.minimum(length, T).astype(jnp.float32)
    seq_mask = jnp.arange(T, dtype=jnp.int32)[None, :] < length[:, None]
    if seq_len_norm:
        # Clamp avoids inf in the discarded where-branch when length[b] == 0.
        denom = jnp.maximum(len_c, 1.0)[:, None] * float(B * D)     # (B, 1)
    else:
        # NOTE: all-zero lengths yield 0.0 here instead of PyTorch's 0/0 NaN.
        denom = jnp.maximum(jnp.sum(len_c), 1.0) * float(D)         # scalar
    w_bt = jnp.where(seq_mask, 1.0 / denom, 0.0).astype(jnp.float32)

    # --- 2D streaming view (native dtype; no upcast pass over x / target) ---
    n_rows = B * T
    x2d = x.reshape(n_rows, D)
    t2d = target.reshape(n_rows, D)
    w2d = w_bt.reshape(n_rows, 1)

    # --- tile sizing against the *physical* (lane-padded) VMEM footprint ----
    d_pad = _round_up(D, 128)
    bytes_per_row = 2 * (d_pad * x2d.dtype.itemsize      # x, double-buffered
                         + d_pad * t2d.dtype.itemsize    # target
                         + 128 * 4)                      # lane-padded weight
    vmem_cap = _vmem_capacity_bytes()
    vmem_budget = min(3 * vmem_cap // 8, 40 << 20)
    if tile_rows is None:
        tile_rows = vmem_budget // bytes_per_row
    tile_rows = max(1, int(tile_rows))
    if tile_rows >= n_rows:
        # Never let a block exceed the array extent: either one exact block
        # (n_rows < 8) or multiple-of-8 blocks with a partial edge block.
        tile_rows = n_rows if n_rows < 8 else (n_rows // 8) * 8
    else:
        tile_rows = max(8, (tile_rows // 8) * 8)
    out_rows = 8 if tile_rows % 8 == 0 else tile_rows

    vmem_limit = min(vmem_cap // 2, 56 << 20)
    vmem_limit = max(vmem_limit, tile_rows * bytes_per_row + (4 << 20))

    # --- grid: per-core "parallel" axis x "arbitrary" reduction axis --------
    n_tiles = pl.cdiv(n_rows, tile_rows)
    p = max(1, min(_num_tensorcores(), n_tiles, 4))
    inner = pl.cdiv(n_tiles, p)
    grid = (p, inner)

    def row_map(c, i):
        # Clamp so the auto-DMA never targets a block fully outside the
        # array; the in-kernel edge path zeroes the duplicated/padded rows.
        return (jnp.minimum(c * inner + i, n_tiles - 1), 0)

    kernel = functools.partial(
        _mse_masked_kernel,
        n_valid_rows=n_rows, tile_rows=tile_rows, out_rows=out_rows)

    partials = pl.pallas_call(
        kernel,
        out_shape=jax.ShapeDtypeStruct((p, out_rows, D), jnp.float32),
        grid=grid,
        in_specs=[
            pl.BlockSpec((tile_rows, D), row_map),   # x (native dtype)
            pl.BlockSpec((tile_rows, D), row_map),   # target (native dtype)
            pl.BlockSpec((tile_rows, 1), row_map),   # per-row weight (f32)
        ],
        out_specs=pl.BlockSpec((1, out_rows, D), lambda c, i: (c, 0, 0)),
        compiler_params=pltpu.CompilerParams(
            dimension_semantics=("parallel", "arbitrary"),
            vmem_limit_bytes=int(vmem_limit)),
    )(x2d, t2d, w2d)

    # Single tiny cross-lane/sublane reduction outside the hot loop.
    return jnp.sum(partials)


def _reference(x, target, length, seq_len_norm):
    """Plain-JAX port of the PyTorch MSELossMasked.forward."""
    B, T, D = x.shape
    xf = x.astype(jnp.float32)
    tf = target.astype(jnp.float32)
    mask = (jnp.arange(T)[None, :] < length[:, None]).astype(jnp.float32)
    mask = mask[:, :, None]
    if seq_len_norm:
        norm_w = mask / jnp.sum(mask, axis=1, keepdims=True)
        out_weights = norm_w / float(B * D)
        mask_e = jnp.broadcast_to(mask, xf.shape)
        loss = (xf * mask_e - tf * mask_e) ** 2
        return jnp.sum(loss * out_weights)
    mask_e = jnp.broadcast_to(mask, xf.shape)
    loss = jnp.sum((xf * mask_e - tf * mask_e) ** 2)
    return loss / jnp.sum(mask_e)


if __name__ == "__main__":
    key = jax.random.PRNGKey(0)
    kx, kt = jax.random.split(key)

    B, T, D = 2, 10, 32
    x = jax.random.normal(kx, (B, T, D), dtype=jnp.float32)
    target = jax.random.normal(kt, (B, T, D), dtype=jnp.float32)
    length = jnp.array([7, 10], dtype=jnp.int32)

    # tile_rows=8 keeps the demo multi-tile so the accumulator carry, the
    # partial edge tile and the clamped duplicate tile paths are exercised.
    for seq_len_norm in (False, True):
        loss = mse_loss_masked(x, target, length,
                               seq_len_norm=seq_len_norm, tile_rows=8)
        loss = jax.block_until_ready(loss)
        ref = _reference(x, target, length, seq_len_norm)
        assert jnp.allclose(loss, ref, rtol=1e-5, atol=1e-6), (
            seq_len_norm, loss, ref)

    # Auto tile-sizing path + native-bf16 streaming path (cast-in-kernel).
    xb = x.astype(jnp.bfloat16)
    tb = target.astype(jnp.bfloat16)
    for seq_len_norm in (False, True):
        loss = mse_loss_masked(xb, tb, length, seq_len_norm=seq_len_norm)
        loss = jax.block_until_ready(loss)
        ref = _reference(xb, tb, length, seq_len_norm)
        assert jnp.allclose(loss, ref, rtol=1e-4, atol=1e-5), (
            seq_len_norm, loss, ref)

    print("KERNEL_OK")
</pallas_src>

<mosaic_0001>
module attributes {stable_mosaic.version = 11 : i64} {
  func.func @_mse_masked_kernel(%arg0: i32, %arg1: i32, %arg2: memref<8x32xf32, #tpu.memory_space<vmem>>, %arg3: memref<8x32xf32, #tpu.memory_space<vmem>>, %arg4: memref<8x1xf32, #tpu.memory_space<vmem>>, %arg5: memref<1x8x32xf32, #tpu.memory_space<vmem>>) attributes {dimension_semantics = [#tpu.dimension_semantics<parallel>, #tpu.dimension_semantics<arbitrary>], iteration_bounds = array<i64: 1, 3>, scalar_prefetch = 0 : i64, scratch_operands = 0 : i64, tpu.core_type = #tpu.core_type<tc>, window_params = [{transform_indices = @transform_0, window_bounds = array<i64: 8, 32>}, {transform_indices = @transform_1, window_bounds = array<i64: 8, 32>}, {transform_indices = @transform_2, window_bounds = array<i64: 8, 1>}, {transform_indices = @transform_3, window_bounds = array<i64: 1, 8, 32>}]} {
    %c0_i32 = arith.constant 0 : i32
    %0 = arith.cmpi eq, %arg1, %c0_i32 : i32
    %1 = arith.extui %0 : i1 to i32
    %c0_i32_0 = arith.constant 0 : i32
    %2 = arith.cmpi ne, %1, %c0_i32_0 : i32
    scf.if %2 {
      %cst = arith.constant 0.000000e+00 : f32
      %20 = vector.broadcast %cst : f32 to vector<1x8x32xf32>
      %c0_9 = arith.constant 0 : index
      %c0_10 = arith.constant 0 : index
      %c0_11 = arith.constant 0 : index
      %21 = vector.load %arg5[%c0_9, %c0_10, %c0_11] : memref<1x8x32xf32, #tpu.memory_space<vmem>>, vector<1x8x32xf32>
      tpu.vector_store %arg5[%c0_9, %c0_10, %c0_11], %20 {strides = array<i32>} : memref<1x8x32xf32, #tpu.memory_space<vmem>>, vector<1x8x32xf32>,
    } else {
    }
    %c0 = arith.constant 0 : index
    %c0_1 = arith.constant 0 : index
    %3 = vector.load %arg2[%c0, %c0_1] : memref<8x32xf32, #tpu.memory_space<vmem>>, vector<8x32xf32>
    %c0_2 = arith.constant 0 : index
    %c0_3 = arith.constant 0 : index
    %4 = vector.load %arg3[%c0_2, %c0_3] : memref<8x32xf32, #tpu.memory_space<vmem>>, vector<8x32xf32>
    %c0_4 = arith.constant 0 : index
    %c0_5 = arith.constant 0 : index
    %5 = vector.load %arg4[%c0_4, %c0_5] : memref<8x1xf32, #tpu.memory_space<vmem>>, vector<8x1xf32>
    %6 = arith.subf %3, %4 : vector<8x32xf32>
    %7 = arith.mulf %6, %6 : vector<8x32xf32>
    %8 = vector.broadcast %5 : vector<8x1xf32> to vector<8x32xf32>
    %9 = arith.mulf %7, %8 : vector<8x32xf32>
    %c3_i32 = arith.constant 3 : i32
    %10 = arith.muli %arg0, %c3_i32 : i32
    %11 = arith.addi %10, %arg1 : i32
    %c8_i32 = arith.constant 8 : i32
    %12 = arith.muli %11, %c8_i32 : i32
    %c8_i32_6 = arith.constant 8 : i32
    %13 = arith.addi %12, %c8_i32_6 : i32
    %c20_i32 = arith.constant 20 : i32
    %14 = arith.cmpi sle, %13, %c20_i32 : i32
    %15 = arith.extui %14 : i1 to i32
    %c0_i32_7 = arith.constant 0 : i32
    %16 = arith.cmpi ne, %15, %c0_i32_7 : i32
    scf.if %16 {
      %20 = vector.shape_cast %9 : vector<8x32xf32> to vector<1x8x32xf32>
      %cst = arith.constant dense<0.000000e+00> : vector<8x32xf32>
      %21 = vector.multi_reduction <add>, %20, %cst [0] : vector<1x8x32xf32> to vector<8x32xf32>
      %c0_9 = arith.constant 0 : index
      %c0_10 = arith.constant 0 : index
      %c0_11 = arith.constant 0 : index
      %22 = vector.load %arg5[%c0_9, %c0_10, %c0_11] : memref<1x8x32xf32, #tpu.memory_space<vmem>>, vector<1x8x32xf32>
      %23 = vector.shape_cast %21 : vector<8x32xf32> to vector<1x8x32xf32>
      %24 = arith.addf %22, %23 : vector<1x8x32xf32>
      %c0_12 = arith.constant 0 : index
      %c0_13 = arith.constant 0 : index
      %c0_14 = arith.constant 0 : index
      %25 = vector.load %arg5[%c0_12, %c0_13, %c0_14] : memref<1x8x32xf32, #tpu.memory_space<vmem>>, vector<1x8x32xf32>
      tpu.vector_store %arg5[%c0_12, %c0_13, %c0_14], %24 {strides = array<i32>} : memref<1x8x32xf32, #tpu.memory_space<vmem>>, vector<1x8x32xf32>,
    } else {
    }
    %true = arith.constant true
    %17 = arith.xori %14, %true : i1
    %18 = arith.extui %17 : i1 to i32
    %c0_i32_8 = arith.constant 0 : i32
    %19 = arith.cmpi ne, %18, %c0_i32_8 : i32
    scf.if %19 {
      %20 = tpu.iota {dimensions = array<i32: 0>} : vector<8x1xi32>
      %21 = vector.broadcast %12 : i32 to vector<8x1xi32>
      %22 = arith.addi %21, %20 : vector<8x1xi32>
      %c20_i32_9 = arith.constant 20 : i32
      %23 = vector.broadcast %c20_i32_9 : i32 to vector<8x1xi32>
      %24 = arith.cmpi slt, %22, %23 : vector<8x1xi32>
      %cst = arith.constant 0.000000e+00 : f32
      %25 = vector.shape_cast %24 : vector<8x1xi1> to vector<8x1xi1>
      %26 = vector.broadcast %25 : vector<8x1xi1> to vector<8x32xi1>
      %27 = vector.broadcast %cst : f32 to vector<8x32xf32>
      %28 = arith.select %26, %9, %27 : vector<8x32xi1>, vector<8x32xf32>
      %29 = vector.shape_cast %28 : vector<8x32xf32> to vector<1x8x32xf32>
      %cst_10 = arith.constant dense<0.000000e+00> : vector<8x32xf32>
      %30 = vector.multi_reduction <add>, %29, %cst_10 [0] : vector<1x8x32xf32> to vector<8x32xf32>
      %c0_11 = arith.constant 0 : index
      %c0_12 = arith.constant 0 : index
      %c0_13 = arith.constant 0 : index
      %31 = vector.load %arg5[%c0_11, %c0_12, %c0_13] : memref<1x8x32xf32, #tpu.memory_space<vmem>>, vector<1x8x32xf32>
      %32 = vector.shape_cast %30 : vector<8x32xf32> to vector<1x8x32xf32>
      %33 = arith.addf %31, %32 : vector<1x8x32xf32>
      %c0_14 = arith.constant 0 : index
      %c0_15 = arith.constant 0 : index
      %c0_16 = arith.constant 0 : index
      %34 = vector.load %arg5[%c0_14, %c0_15, %c0_16] : memref<1x8x32xf32, #tpu.memory_space<vmem>>, vector<1x8x32xf32>
      tpu.vector_store %arg5[%c0_14, %c0_15, %c0_16], %33 {strides = array<i32>} : memref<1x8x32xf32, #tpu.memory_space<vmem>>, vector<1x8x32xf32>,
    } else {
    }
    return
  }
  func.func @transform_0(%arg0: i32, %arg1: i32) -> (i32, i32) {
    %c3_i32 = arith.constant 3 : i32
    %0 = arith.muli %arg0, %c3_i32 : i32
    %1 = arith.addi %0, %arg1 : i32
    %c2_i32 = arith.constant 2 : i32
    %2 = arith.minsi %1, %c2_i32 : i32
    %c0_i32 = arith.constant 0 : i32
    %c0_i32_0 = arith.constant 0 : i32
    return %2, %c0_i32 : i32, i32
  }
  func.func @transform_1(%arg0: i32, %arg1: i32) -> (i32, i32) {
    %c3_i32 = arith.constant 3 : i32
    %0 = arith.muli %arg0, %c3_i32 : i32
    %1 = arith.addi %0, %arg1 : i32
    %c2_i32 = arith.constant 2 : i32
    %2 = arith.minsi %1, %c2_i32 : i32
    %c0_i32 = arith.constant 0 : i32
    %c0_i32_0 = arith.constant 0 : i32
    return %2, %c0_i32 : i32, i32
  }
  func.func @transform_2(%arg0: i32, %arg1: i32) -> (i32, i32) {
    %c3_i32 = arith.constant 3 : i32
    %0 = arith.muli %arg0, %c3_i32 : i32
    %1 = arith.addi %0, %arg1 : i32
    %c2_i32 = arith.constant 2 : i32
    %2 = arith.minsi %1, %c2_i32 : i32
    %c0_i32 = arith.constant 0 : i32
    %c0_i32_0 = arith.constant 0 : i32
    return %2, %c0_i32 : i32, i32
  }
  func.func @transform_3(%arg0: i32, %arg1: i32) -> (i32, i32, i32) {
    %c0_i32 = arith.constant 0 : i32
    %c0_i32_0 = arith.constant 0 : i32
    %c0_i32_1 = arith.constant 0 : i32
    return %arg0, %c0_i32, %c0_i32_0 : i32, i32, i32
  }
}

</mosaic_0001>

<llo_original>
// kernel: tpu_custom_call.1
$region0: #{tpu_custom_call.1}
  #allocation0 [shape = 'u32[]', space=smem, size = 0x4, offset = 0x4, fixed_abs, tag = 'smem constant byte address 0x4 - core index']
  #allocation1 [shape = 'u32[72,128]{1,0:T(1,128)}', space=vmem, size = 0x9000, scoped, tag = 'internal scratch']
  %s0 = inlined_call_operand.vmem [shape: f32[20,32], index: 0, kind: input, shape index: {}]
  %s1 = inlined_call_operand.hbm [shape: f32[20,32], index: 1, kind: input, shape index: {}]
  %s2 = inlined_call_operand.vmem [shape: f32[20,1], index: 2, kind: input, shape index: {}]
  %s3 = inlined_call_operand.hbm [shape: f32[1,8,32], index: 3, kind: output, shape index: {}]
  %s4 = sld [smem:[#allocation0]]
  $region61: #{tpu_custom_call.1} parent=0
    _
  %s6 = ssub.s32 1, %s4
  %s7 = scalar_select 0, %s6, %s4
  $region1: #{tpu_custom_call.1} parent=0
    #allocation2 [shape = 'u8[8192]{0}', space=vmem, size = 0x2000, scoped, tag = 'input window, operand 1']
    #allocation3 [shape = 's32[2]{0}', space=sflag, size = 0x8, scoped, tag = 'scoped memory for tpu_custom_call.1']
    #allocation4 [shape = 's32[2]{0}', space=sflag, size = 0x8, scoped, tag = 'scoped memory for tpu_custom_call.1']
    #allocation5 [shape = 'u8[4096]{0}', space=vmem, size = 0x1000, scoped, tag = 'output window, operand 0, single buffered']
    %8 = vsyncpa [#allocation3], 0
    %s9 = scalar_lea.sflag [#allocation3], 1
    %10 = vsyncpa %s9, 0
    %11 = vsyncpa [#allocation4], 0
    loop: start=0, step=1, limit=5
    $region2: #{tpu_custom_call.1} parent=1 // loop_pre_header
      _
    $region3: #{tpu_custom_call.1} parent=1 // loop_header
      %s13 = sphi 0, %s17
      %p14 = scmp.ge.s32.totalorder %s13, 5
      %s20 = sphi 0, %s32
      %s21 = sphi 0, %s28
      %s22 = sphi 0, %s20
      %s23 = sphi 0, %s21
      %s24 = sphi 0, %s22
      %s25 = sphi 0, %s23
      %s43 = sphi 0, %s45
      %s46 = sphi 0, %s43
      %s47 = sphi 0, %s46
      %s63 = sphi 0, %s47
      %s77 = sphi 0, %s79
      %s80 = sphi 0, %s77
      %s81 = sphi 0, %s80
      %s97 = sphi 0, %s81
      %s111 = sphi 0, %s113
      %s114 = sphi 0, %s111
      %s115 = sphi 0, %s114
      %s131 = sphi 0, %s115
      %s137 = sphi 0, %s139
      %s140 = sphi 0, %s137
      %s141 = sphi 0, %s140
      %s157 = sphi 0, %s141
    $region4: #{tpu_custom_call.1} parent=1 // loop_header_branch
      %16 = sbr.rel (%p14) target = $region8
    $region5: #{tpu_custom_call.1} parent=1 // loop_body
      %s18 = ssub.s32 %s13, 1
      %s19 = ssub.s32 %s13, 2
      %s26 = sadd.s32 1, %s21
      %p27 = scmp.ge.s32.totalorder %s26, 3
      %s28 = scalar_select %p27, 0, %s26
      %s29 = sadd.s32 1, %s20
      %s30 = scalar_select %p27, %s29, %s20
      %p31 = scmp.ge.s32.totalorder %s30, 1
      %s32 = scalar_select %p31, 0, %s30
      %s33 = smul.u32 %s20, 3
      %s34 = sadd.s32 %s33, %s21
      %p35 = scmp.lt.s32.totalorder %s34, 2
      %s36 = scalar_select %p35, %s34, 2
      %s37 = smul.u32 %s32, 3
      %s38 = sadd.s32 %s37, %s28
      %p39 = scmp.lt.s32.totalorder %s38, 2
      %s40 = scalar_select %p39, %s38, 2
      %s41 = ssub.s32 %s36, %s40
      %p42 = scmp.eq.s32.totalorder %s41, 0
      %s44 = sadd.s32 %s43, 1
      %s45 = scalar_select %p42, %s43, %s44
      %p48 = pneg %p42
      %p49 = scmp.eq.s32.totalorder %s13, 2
      %p50 = por %p48, %p49
      %p51 = scmp.ne.s32.totalorder %s43, %s46
      %p52 = scmp.eq.s32.totalorder %s13, 0
      %p53 = por %p51, %p52
      %p54 = scmp.ne.s32.totalorder %s43, %s46
      %p55 = scmp.eq.s32.totalorder %s18, 2
      %p56 = por %p54, %p55
      %p57 = scmp.ne.s32.totalorder %s46, %s47
      %p58 = scmp.eq.s32.totalorder %s18, 0
      %p59 = por %p57, %p58
      %p60 = scmp.ne.s32.totalorder %s46, %s47
      %p61 = scmp.eq.s32.totalorder %s19, 2
      %p62 = por %p60, %p61
      %p64 = scmp.ne.s32.totalorder %s47, %s63
      %p65 = scmp.eq.s32.totalorder %s19, 0
      %p66 = por %p64, %p65
      %s67 = smul.u32 %s20, 3
      %s68 = sadd.s32 %s67, %s21
      %p69 = scmp.lt.s32.totalorder %s68, 2
      %s70 = scalar_select %p69, %s68, 2
      %s71 = smul.u32 %s32, 3
      %s72 = sadd.s32 %s71, %s28
      %p73 = scmp.lt.s32.totalorder %s72, 2
      %s74 = scalar_select %p73, %s72, 2
      %s75 = ssub.s32 %s70, %s74
      %p76 = scmp.eq.s32.totalorder %s75, 0
      %s78 = sadd.s32 %s77, 1
      %s79 = scalar_select %p76, %s77, %s78
      %p82 = pneg %p76
      %p83 = scmp.eq.s32.totalorder %s13, 2
      %p84 = por %p82, %p83
      %p85 = scmp.ne.s32.totalorder %s77, %s80
      %p86 = scmp.eq.s32.totalorder %s13, 0
      %p87 = por %p85, %p86
      %p88 = scmp.ne.s32.totalorder %s77, %s80
      %p89 = scmp.eq.s32.totalorder %s18, 2
      %p90 = por %p88, %p89
      %p91 = scmp.ne.s32.totalorder %s80, %s81
      %p92 = scmp.eq.s32.totalorder %s18, 0
      %p93 = por %p91, %p92
      %p94 = scmp.ne.s32.totalorder %s80, %s81
      %p95 = scmp.eq.s32.totalorder %s19, 2
      %p96 = por %p94, %p95
      %p98 = scmp.ne.s32.totalorder %s81, %s97
      %p99 = scmp.eq.s32.totalorder %s19, 0
      %p100 = por %p98, %p99
      %s101 = smul.u32 %s20, 3
      %s102 = sadd.s32 %s101, %s21
      %p103 = scmp.lt.s32.totalorder %s102, 2
      %s104 = scalar_select %p103, %s102, 2
      %s105 = smul.u32 %s32, 3
      %s106 = sadd.s32 %s105, %s28
      %p107 = scmp.lt.s32.totalorder %s106, 2
      %s108 = scalar_select %p107, %s106, 2
      %s109 = ssub.s32 %s104, %s108
      %p110 = scmp.eq.s32.totalorder %s109, 0
      %s112 = sadd.s32 %s111, 1
      %s113 = scalar_select %p110, %s111, %s112
      %p116 = pneg %p110
      %p117 = scmp.eq.s32.totalorder %s13, 2
      %p118 = por %p116, %p117
      %p119 = scmp.ne.s32.totalorder %s111, %s114
      %p120 = scmp.eq.s32.totalorder %s13, 0
      %p121 = por %p119, %p120
      %p122 = scmp.ne.s32.totalorder %s111, %s114
      %p123 = scmp.eq.s32.totalorder %s18, 2
      %p124 = por %p122, %p123
      %p125 = scmp.ne.s32.totalorder %s114, %s115
      %p126 = scmp.eq.s32.totalorder %s18, 0
      %p127 = por %p125, %p126
      %p128 = scmp.ne.s32.totalorder %s114, %s115
      %p129 = scmp.eq.s32.totalorder %s19, 2
      %p130 = por %p128, %p129
      %p132 = scmp.ne.s32.totalorder %s115, %s131
      %p133 = scmp.eq.s32.totalorder %s19, 0
      %p134 = por %p132, %p133
      %s135 = ssub.s32 %s20, %s32
      %p136 = scmp.eq.s32.totalorder %s135, 0
      %s138 = sadd.s32 %s137, 1
      %s139 = scalar_select %p136, %s137, %s138
      %p142 = pneg %p136
      %p143 = scmp.eq.s32.totalorder %s13, 2
      %p144 = por %p142, %p143
      %p145 = scmp.ne.s32.totalorder %s137, %s140
      %p146 = scmp.eq.s32.totalorder %s13, 0
      %p147 = por %p145, %p146
      %p148 = scmp.ne.s32.totalorder %s137, %s140
      %p149 = scmp.eq.s32.totalorder %s18, 2
      %p150 = por %p148, %p149
      %p151 = scmp.ne.s32.totalorder %s140, %s141
      %p152 = scmp.eq.s32.totalorder %s18, 0
      %p153 = por %p151, %p152
      %p154 = scmp.ne.s32.totalorder %s140, %s141
      %p155 = scmp.eq.s32.totalorder %s19, 2
      %p156 = por %p154, %p155
      %p158 = scmp.ne.s32.totalorder %s141, %s157
      %p159 = scmp.eq.s32.totalorder %s19, 0
      %p160 = por %p158, %p159
      %p161 = scmp.le.s32.totalorder 1, %s13
      %p162 = scmp.lt.s32.totalorder %s13, 4
      %p163 = pnand %p161, %p162
      %p164 = pneg %p163
      // Predicated region
      $region9: #{tpu_custom_call.1} parent=5 // pred_check
        _
      $region10: #{tpu_custom_call.1} parent=5 // pred_check_branch
        %166 = sbr.rel (%p163) target = $region12
      $region11: #{tpu_custom_call.1} parent=5 // pred_region
        %s167 = ssub.s32 %s13, 1
      $region12: #{tpu_custom_call.1} parent=5 // pred_fallthru
        _
      %p168 = scmp.lt.s32.totalorder %s13, 3
      // Predicated region
      $region13: #{tpu_custom_call.1} parent=5 // pred_check
        %p169 = pneg %p168
      $region14: #{tpu_custom_call.1} parent=5 // pred_check_branch
        %171 = sbr.rel (%p169) target = $region16
      $region15: #{tpu_custom_call.1} parent=5 // pred_region
        // Predicated region
        $region17: #{tpu_custom_call.1} parent=15 // pred_check
          %p172 = pneg %p53
        $region18: #{tpu_custom_call.1} parent=15 // pred_check_branch
          %174 = sbr.rel (%p172) target = $region20
        $region19: #{tpu_custom_call.1} parent=15 // pred_region
          %s175 = smul.u32 %s20, 3
          %s176 = sadd.s32 %s175, %s21
          %p177 = scmp.lt.s32.totalorder %s176, 2
          %s178 = scalar_select %p177, %s176, 2
          %p179 = scmp.lt.s32.totalorder %s178, 2
          %s180 = scalar_select %p179, %s178, 2
          %s181 = smul.addr %s180, 8
          %s182 = scalar_lea.vmem %s0, %s181
          %s183 = smul.u32 %s20, 3
          %s184 = sadd.s32 %s183, %s21
          %p185 = scmp.lt.s32.totalorder %s184, 2
          %s186 = scalar_select %p185, %s184, 2
        $region20: #{tpu_custom_call.1} parent=15 // pred_fallthru
          _
        // Predicated region
        $region21: #{tpu_custom_call.1} parent=15 // pred_check
          %p187 = pneg %p87
        $region22: #{tpu_custom_call.1} parent=15 // pred_check_branch
          %189 = sbr.rel (%p187) target = $region24
        $region23: #{tpu_custom_call.1} parent=15 // pred_region
          %s190 = sand.u32 %s77, 1
          %s191 = scalar_lea.sflag [#allocation3], %s190
          %s192 = sand.u32 %s77, 1
          %s193 = smul.addr %s192, 8
          %s194 = scalar_lea.vmem [#allocation2], %s193
          %s195 = smul.u32 %s20, 3
          %s196 = sadd.s32 %s195, %s21
          %p197 = scmp.lt.s32.totalorder %s196, 2
          %s198 = scalar_select %p197, %s196, 2
          %200 = vsyncadd %s191, 0
          %s201 = smul.addr %s198, 8
          %s202 = scalar_lea.hbm %s1, %s201
          %s204 = sshll.u32 %s202, 4
          %s205 = int_to_ptr.hbm [resolvable:$true] %s204
          %s206 = sshll.u32 %s194, 4
          %s207 = int_to_ptr.vmem [resolvable:$true] %s206
          %209 = dma.hbm_to_vmem [thread:$0]  %s205, 128, %s207, %s191
        $region24: #{tpu_custom_call.1} parent=15 // pred_fallthru
          _
        // Predicated region
        $region25: #{tpu_custom_call.1} parent=15 // pred_check
          %p210 = pneg %p121
        $region26: #{tpu_custom_call.1} parent=15 // pred_check_branch
          %212 = sbr.rel (%p210) target = $region28
        $region27: #{tpu_custom_call.1} parent=15 // pred_region
          %s213 = smul.u32 %s20, 3
          %s214 = sadd.s32 %s213, %s21
          %p215 = scmp.lt.s32.totalorder %s214, 2
          %s216 = scalar_select %p215, %s214, 2
          %p217 = scmp.lt.s32.totalorder %s216, 2
          %s218 = scalar_select %p217, %s216, 2
          %s219 = smul.addr %s218, 8
          %s220 = scalar_lea.vmem %s2, %s219
          %s221 = smul.u32 %s20, 3
          %s222 = sadd.s32 %s221, %s21
          %p223 = scmp.lt.s32.totalorder %s222, 2
          %s224 = scalar_select %p223, %s222, 2
        $region28: #{tpu_custom_call.1} parent=15 // pred_fallthru
          _
      $region16: #{tpu_custom_call.1} parent=5 // pred_fallthru
        _
      %p225 = scmp.le.s32.totalorder 1, %s13
      %p226 = scmp.lt.s32.totalorder %s13, 4
      %p227 = pnand %p225, %p226
      %p228 = pneg %p227
      // Predicated region
      $region29: #{tpu_custom_call.1} parent=5 // pred_check
        _
      $region30: #{tpu_custom_call.1} parent=5 // pred_check_branch
        %230 = sbr.rel (%p227) target = $region32
      $region31: #{tpu_custom_call.1} parent=5 // pred_region
        %s231 = ssub.s32 %s13, 1
        %s232 = sand.u32 %s80, 1
        %s233 = scalar_lea.sflag [#allocation3], %s232
        %s234 = sand.u32 %s80, 1
        %s235 = smul.addr %s234, 8
        %s236 = scalar_lea.vmem [#allocation2], %s235
        // Predicated region
        $region33: #{tpu_custom_call.1} parent=31 // pred_check
          %p237 = pneg %p93
        $region34: #{tpu_custom_call.1} parent=31 // pred_check_branch
          %239 = sbr.rel (%p237) target = $region36
        $region35: #{tpu_custom_call.1} parent=31 // pred_region
          %241 = dma.done %s233, 128
        $region36: #{tpu_custom_call.1} parent=31 // pred_fallthru
          _
        %s242 = smul.u32 %s22, 3
        %s243 = sadd.s32 %s242, %s23
        %p244 = scmp.lt.s32.totalorder %s243, 2
        %s245 = scalar_select %p244, %s243, 2
        %p246 = scmp.lt.s32.totalorder %s245, 2
        %s247 = scalar_select %p246, %s245, 2
        %s248 = smul.addr %s247, 8
        %s249 = scalar_lea.vmem %s0, %s248
        %p250 = pneg %p59
        %p251 = pneg %p56
        %s252 = sand.u32 %s80, 1
        %s253 = scalar_lea.sflag [#allocation3], %s252
        %s254 = sand.u32 %s80, 1
        %s255 = smul.addr %s254, 8
        %s256 = scalar_lea.vmem [#allocation2], %s255
        %p257 = pneg %p93
        %p258 = pneg %p90
        %s259 = smul.u32 %s22, 3
        %s260 = sadd.s32 %s259, %s23
        %p261 = scmp.lt.s32.totalorder %s260, 2
        %s262 = scalar_select %p261, %s260, 2
        %p263 = scmp.lt.s32.totalorder %s262, 2
        %s264 = scalar_select %p263, %s262, 2
        %s265 = smul.addr %s264, 8
        %s266 = scalar_lea.vmem %s2, %s265
        %p267 = pneg %p127
        %p268 = pneg %p124
        %p269 = pneg %p153
        %p270 = pneg %p150
        %s271 = smul.u32 %s22, 3
        %s272 = sadd.s32 %s271, %s23
        %p273 = scmp.lt.s32.totalorder %s272, 2
        %s274 = scalar_select %p273, %s272, 2
        %p275 = scmp.lt.s32.totalorder %s274, 2
        %s276 = scalar_select %p275, %s274, 2
        %s277 = smul.addr %s276, 8
        %s278 = scalar_lea.vmem %s0, %s277
        %s279 = smul.u32 %s22, 3
        %s280 = sadd.s32 %s279, %s23
        %p281 = scmp.lt.s32.totalorder %s280, 2
        %s282 = scalar_select %p281, %s280, 2
        %s283 = smul.u32 %s22, 3
        %s284 = sadd.s32 %s283, %s23
        %p285 = scmp.lt.s32.totalorder %s284, 2
        %s286 = scalar_select %p285, %s284, 2
        %s287 = smul.u32 %s22, 3
        %s288 = sadd.s32 %s287, %s23
        %p289 = scmp.lt.s32.totalorder %s288, 2
        %s290 = scalar_select %p289, %s288, 2
        %p291 = scmp.lt.s32.totalorder %s290, 2
        %s292 = scalar_select %p291, %s290, 2
        %s293 = smul.addr %s292, 8
        %s294 = scalar_lea.vmem %s2, %s293
        %s295 = smul.u32 %s22, 3
        %s296 = sadd.s32 %s295, %s23
        %p297 = scmp.lt.s32.totalorder %s296, 2
        %s298 = scalar_select %p297, %s296, 2
        %p299 = scmp.eq.s32.totalorder %s23, 0
        // Predicated region
        $region37: #{tpu_custom_call.1} parent=31 // pred_check
          %p300 = pneg %p299
        $region38: #{tpu_custom_call.1} parent=31 // pred_check_branch
          %302 = sbr.rel (%p300) target = $region40
        $region39: #{tpu_custom_call.1} parent=31 // pred_region
          %vm303 = vcmask 261120
          %304 = vst.msk [vmem:[#allocation5] sm:$0xff] %vm303, 0.0
        $region40: #{tpu_custom_call.1} parent=31 // pred_fallthru
          _
        %v305 = vld [vmem:[%s278] sm:$0xff]
        %v306 = vld [vmem:[%s236] sm:$0xff]
        %v307 = vld [vmem:[%s294] sm:$0xff]
        %v308 = vsub.f32 %v305, %v306
        %v309 = vmul.f32 %v308, %v308
        %311 = vset.pattern.permute.xlu0 0
        %312 = vperm.xlu0 %311, %v307
        %v313 = vpop.permute.xlu0 %312
        %v315 = vmul.f32 %v309, %v313
        %s316 = smul.u32 %s22, 3
        %s317 = sadd.s32 %s316, %s23
        %s318 = smul.u32 %s317, 8
        %s319 = sadd.s32 %s318, 8
        %p320 = scmp.le.s32.totalorder %s319, 20
        // Predicated region
        $region41: #{tpu_custom_call.1} parent=31 // pred_check
          %p321 = pneg %p320
        $region42: #{tpu_custom_call.1} parent=31 // pred_check_branch
          %323 = sbr.rel (%p321) target = $region44
        $region43: #{tpu_custom_call.1} parent=31 // pred_region
          %v324 = vadd.f32 %v315, 0.0
          %v325 = vld [vmem:[#allocation5] sm:$0xff]
          %v326 = vadd.f32 %v325, %v324
          %vm327 = vcmask 261120
          %328 = vst.msk [vmem:[#allocation5] sm:$0xff] %vm327, %v326
        $region44: #{tpu_custom_call.1} parent=31 // pred_fallthru
          _
        %p329 = scmp.gt.s32.totalorder %s319, 20
        // Predicated region
        $region45: #{tpu_custom_call.1} parent=31 // pred_check
          %p330 = pneg %p329
        $region46: #{tpu_custom_call.1} parent=31 // pred_check_branch
          %332 = sbr.rel (%p330) target = $region48
        $region47: #{tpu_custom_call.1} parent=31 // pred_region
          %v333 = vlaneseq
          %v334 = vshrl.u32 %v333, 7
          %v335 = vstv %s318
          %v336 = vadd.s32 %v335, %v334
          %vm337 = vcmp.lt.s32.totalorder %v336, 20
          %v338 = vsel %vm337, 1, 0
          %vm339 = vcmp.eq.s32.totalorder %v338, 1
          %v340 = vsel %vm339, %v315, 0.0
          %v341 = vadd.f32 %v340, 0.0
          %v342 = vld [vmem:[#allocation5] sm:$0xff]
          %v343 = vadd.f32 %v342, %v341
          %vm344 = vcmask 261120
          %345 = vst.msk [vmem:[#allocation5] sm:$0xff] %vm344, %v343
        $region48: #{tpu_custom_call.1} parent=31 // pred_fallthru
          _
        // Predicated region
        $region49: #{tpu_custom_call.1} parent=31 // pred_check
          %p346 = pneg %p150
        $region50: #{tpu_custom_call.1} parent=31 // pred_check_branch
          %348 = sbr.rel (%p346) target = $region52
        $region51: #{tpu_custom_call.1} parent=31 // pred_region
          %350 = vsyncadd [#allocation4], 0
          %s351 = smul.addr %s22, 8
          %s352 = scalar_lea.hbm %s3, %s351
          %s354 = sshll.u32 [#allocation5], 4
          %s355 = int_to_ptr.vmem [resolvable:$true] %s354
          %s356 = sshll.u32 %s352, 4
          %s357 = int_to_ptr.hbm [resolvable:$true] %s356
          %359 = dma.vmem_to_hbm [thread:$0]  %s355, 128, %s357, [#allocation4]
        $region52: #{tpu_custom_call.1} parent=31 // pred_fallthru
          _
        // Predicated region
        $region53: #{tpu_custom_call.1} parent=31 // pred_check
          %p360 = pneg %p150
        $region54: #{tpu_custom_call.1} parent=31 // pred_check_branch
          %362 = sbr.rel (%p360) target = $region56
        $region55: #{tpu_custom_call.1} parent=31 // pred_region
          %364 = dma.done [#allocation4], 128
        $region56: #{tpu_custom_call.1} parent=31 // pred_fallthru
          _
      $region32: #{tpu_custom_call.1} parent=5 // pred_fallthru
        _
      %p365 = scmp.le.s32.totalorder 2, %s13
      // Predicated region
      $region57: #{tpu_custom_call.1} parent=5 // pred_check
        %p366 = pneg %p365
      $region58: #{tpu_custom_call.1} parent=5 // pred_check_branch
        %368 = sbr.rel (%p366) target = $region60
      $region59: #{tpu_custom_call.1} parent=5 // pred_region
        %s369 = ssub.s32 %s13, 2
      $region60: #{tpu_custom_call.1} parent=5 // pred_fallthru
        _
    $region6: #{tpu_custom_call.1} parent=1 // loop_footer
      %s17 = sadd.s32 1, %s13
    $region7: #{tpu_custom_call.1} parent=1 // loop_footer_branch
      %12 = sbr.rel target = $region3
    $region8: #{tpu_custom_call.1} parent=1 // loop_exit
      _
    %370 = vsyncpa [#allocation3], 1
    %s371 = scalar_lea.sflag [#allocation3], 1
    %372 = vsyncpa %s371, 1
    %373 = vsyncpa [#allocation4], 1
    %s374 = scalar_lea.sflag [#allocation4], 1
    %375 = vsyncpa %s374, 1

</llo_original>
